<compile_context>
chip_gen: v7x
topology: tpu7x:2x2x1
jax: 0.10.0
libtpu: 0.0.40
codegen_flags: <defaults>
</compile_context>

<pallas_src>
import jax
import jax.numpy as jnp
from jax.experimental import pallas as pl
from jax.experimental.pallas import tpu as pltpu


# ----------------------------------------------------------------------------
# Kernel
# ----------------------------------------------------------------------------
def _rotate2d_kernel(x_ref, theta_ref, o_ref):
    x = x_ref[...].astype(jnp.float32)          # (TB, TL) lane-dense data
    theta = theta_ref[...]                      # (TB, 1)  f32 angles
    c = jnp.cos(theta)                          # EUP slot — free under HBM bound
    s = jnp.sin(theta)
    tl = x.shape[-1]

    # (1, TL) lane-parity constants, broadcast over sublanes (not (TB, TL)).
    lane = jax.lax.broadcasted_iota(jnp.int32, (1, tl), dimension=1)
    even = (lane & 1) == 0                      # lanes holding the x component
    sign = jnp.where(even, 1.0, -1.0).astype(jnp.float32)

    # partner[i] = x[i+1] on even lanes, x[i-1] on odd lanes (swap within each
    # (x, y) pair).  pltpu.roll follows jnp.roll semantics: roll(x, k)[i] =
    # x[i-k].  Wrapped-around elements are never selected since tl is even.
    partner = jnp.where(even,
                        pltpu.roll(x, tl - 1, axis=1),   # x[i+1]
                        pltpu.roll(x, 1, axis=1))        # x[i-1]

    # out_even =  c*x_even + s*y ; out_odd = c*y - s*x_even
    o_ref[...] = (c * x + (s * sign) * partner).astype(o_ref.dtype)


# ----------------------------------------------------------------------------
# Tile selection
# ----------------------------------------------------------------------------
def _sublane_quantum(dtype):
    # 8 for f32, 16 for bf16, 32 for int8/fp8 (sub-32-bit sublane packing).
    return max(8, 32 // jnp.dtype(dtype).itemsize)


def _pick_tile(total, quantum, target):
    """Largest divisor of `total` that is a multiple of `quantum` and <= target.
    Falls back to the full axis (always a legal block size)."""
    if total <= target:
        return total
    t = (target // quantum) * quantum
    while t >= quantum:
        if total % t == 0:
            return t
        t -= quantum
    return total


def _choose_tiles(B, L, dtype):
    itemsize = jnp.dtype(dtype).itemsize
    qb = _sublane_quantum(dtype)
    tl = _pick_tile(L, 128, 4096)
    # Aim for ~4 MiB blocks, but cap tb so the leading "parallel" batch axis
    # has >= 2 blocks whenever B allows: keeps both v7x TensorCores busy and
    # gives the DMA pipeline something to overlap.
    target_tb = max(qb, (4 * 1024 * 1024) // max(tl * itemsize, 1))
    target_tb = max(qb, (target_tb // qb) * qb)
    if B >= 2 * qb:
        target_tb = min(target_tb, max(qb, (B // (2 * qb)) * qb))
    tb = _pick_tile(B, qb, target_tb)
    return tb, tl


# ----------------------------------------------------------------------------
# pallas_call wrapper + dispatcher
# ----------------------------------------------------------------------------
def rotate2d_pallas(flat, theta_col, *, tb, tl):
    """flat: (B, L) with L = num_particles*2 interleaved (x0,y0,x1,y1,...).
    theta_col: (B, 1) f32 per-batch rotation angles.  Returns rotated (B, L)."""
    B, L = flat.shape
    assert B % tb == 0 and L % tl == 0 and tl % 2 == 0
    itemsize = jnp.dtype(flat.dtype).itemsize
    grid = (B // tb, L // tl)
    return pl.pallas_call(
        _rotate2d_kernel,
        out_shape=jax.ShapeDtypeStruct((B, L), flat.dtype),
        grid_spec=pltpu.PrefetchScalarGridSpec(
            num_scalar_prefetch=0,
            grid=grid,
            in_specs=[
                pl.BlockSpec((tb, tl), lambda b, l: (b, l)),
                pl.BlockSpec((tb, 1), lambda b, l: (b, 0)),
            ],
            out_specs=pl.BlockSpec((tb, tl), lambda b, l: (b, l)),
        ),
        compiler_params=pltpu.CompilerParams(
            dimension_semantics=("parallel", "parallel"),
            vmem_limit_bytes=48 * 1024 * 1024,
        ),
        cost_estimate=pl.CostEstimate(
            flops=4 * B * L,
            transcendentals=2 * B * (L // tl),
            bytes_accessed=2 * B * L * itemsize + 4 * B,
        ),
    )(flat, theta_col)


def _rotate2d_xla(flat, theta):
    """Plain-XLA fallback for small / ragged lane widths."""
    B, L = flat.shape
    d3 = flat.reshape(B, L // 2, 2).astype(jnp.float32)
    c = jnp.cos(theta)[:, None]
    s = jnp.sin(theta)[:, None]
    x, y = d3[..., 0], d3[..., 1]
    out = jnp.stack([c * x + s * y, c * y - s * x], axis=-1)
    return out.reshape(B, L).astype(flat.dtype)


def rotate2d(flat, theta):
    """theta: (B,) f32 angles.  Dispatches to the Pallas kernel when the lane
    axis is wide and 128-aligned (lane-dense streaming); plain XLA otherwise."""
    B, L = flat.shape
    assert L % 2 == 0, "last dim must be num_particles * 2"
    if L < 128 or L % 128 != 0:
        # TODO(synk): sub-128 / ragged lane widths hit masked partial stores and
        # the per-call grid overhead dominates; plain XLA fusion wins here.
        return _rotate2d_xla(flat, theta)
    tb, tl = _choose_tiles(B, L, flat.dtype)
    if tb * tl * jnp.dtype(flat.dtype).itemsize > 16 * 1024 * 1024:
        # No divisor-based tiling keeps the block inside the VMEM budget
        # (awkward prime-ish B); stay on the XLA path rather than risk OOM.
        return _rotate2d_xla(flat, theta)
    return rotate2d_pallas(flat, theta.astype(jnp.float32)[:, None], tb=tb, tl=tl)


# ----------------------------------------------------------------------------
# Module-equivalent wrapper
# ----------------------------------------------------------------------------
def _random_angles(key, batch):
    # torch.rand(len(data)) * 2 * pi — always f32 so bf16 data keeps f32 angles.
    return jax.random.uniform(key, (batch,), dtype=jnp.float32) * (2.0 * jnp.pi)


class Random2DRotationTransform:
    """JAX/Pallas port of the PyTorch Random2DRotationTransform (dim == 2)."""

    def __init__(self, num_particles, dim):
        assert dim == 2, "this transform applies 2-D (cos/sin) rotations"
        self.num_particles = num_particles
        self.dim = dim

    def __call__(self, data, key):
        flat = data.reshape(-1, self.num_particles * self.dim)
        B = flat.shape[0]
        # torch.rand's implicit global RNG is replaced by an explicit JAX key.
        theta = _random_angles(key, B)
        out = rotate2d(flat, theta)
        if B == 1:
            # Matches the original's final `reshape(num_particles * dim)`.
            return out.reshape(self.num_particles * self.dim)
        # TODO(synk): the PyTorch module's final reshape only works for a single
        # sample; keep the batched (B, num_particles*dim) layout for B > 1.
        return out


# ----------------------------------------------------------------------------
# Reference + self-test
# ----------------------------------------------------------------------------
def _reference_rotate(flat, theta):
    B, L = flat.shape
    d3 = flat.reshape(B, L // 2, 2).astype(jnp.float32)
    c, s = jnp.cos(theta), jnp.sin(theta)
    row0 = jnp.stack([c, -s], axis=-1)
    row1 = jnp.stack([s, c], axis=-1)
    rot = jnp.stack([row0, row1], axis=1)        # (B, 2, 2): [[c,-s],[s,c]]
    out = jnp.einsum('bij,bki->bkj', rot, d3)
    return out.reshape(B, L)


if __name__ == "__main__":
    key = jax.random.PRNGKey(0)
    k1, kr1, k2, kr2, k3, kr3, k4 = jax.random.split(key, 7)

    # --- Test 1: Pallas path, batched; batch axis splits into >= 2 blocks ----
    num_particles, dim = 128, 2                  # L = 256 lanes
    B = 16
    transform = Random2DRotationTransform(num_particles, dim)
    x1 = jax.random.normal(k1, (B, num_particles * dim), jnp.float32)
    out1 = jax.block_until_ready(transform(x1, kr1))
    ref1 = _reference_rotate(x1, _random_angles(kr1, B))
    assert out1.shape == (B, num_particles * dim)
    assert jnp.allclose(out1, ref1, atol=1e-4, rtol=1e-4)

    # --- Test 2: explicit multi-tile grid (grid = (4, 4)) --------------------
    B2, L2 = 32, 512
    x2 = jax.random.normal(k2, (B2, L2), jnp.float32)
    theta2 = _random_angles(kr2, B2)
    out2 = jax.block_until_ready(
        rotate2d_pallas(x2, theta2[:, None], tb=8, tl=128))
    ref2 = _reference_rotate(x2, theta2)
    assert jnp.allclose(out2, ref2, atol=1e-4, rtol=1e-4)

    # --- Test 3: single sample, small L -> XLA fallback (module semantics) ---
    transform_small = Random2DRotationTransform(16, 2)      # L = 32 < 128
    x3 = jax.random.normal(k3, (16 * 2,), jnp.float32)
    out3 = jax.block_until_ready(transform_small(x3, kr3))
    ref3 = _reference_rotate(x3.reshape(1, -1), _random_angles(kr3, 1))
    assert out3.shape == (16 * 2,)
    assert jnp.allclose(out3, ref3.reshape(-1), atol=1e-4, rtol=1e-4)

    # --- Test 4: bf16 data path (f32 angles, dtype-aware sublane quantum) ----
    x4 = jax.random.normal(k4, (B, num_particles * dim), jnp.float32)
    theta4 = _random_angles(kr1, B)
    out4 = jax.block_until_ready(rotate2d(x4.astype(jnp.bfloat16), theta4))
    ref4 = _reference_rotate(x4.astype(jnp.bfloat16).astype(jnp.float32), theta4)
    assert out4.dtype == jnp.bfloat16
    assert jnp.allclose(out4.astype(jnp.float32), ref4, atol=3e-2, rtol=3e-2)

    print("KERNEL_OK")
</pallas_src>

<mosaic_0001>
module attributes {stable_mosaic.version = 11 : i64} {
  func.func @_rotate2d_kernel(%arg0: i32, %arg1: i32, %arg2: memref<8x256xf32, #tpu.memory_space<vmem>>, %arg3: memref<8x1xf32, #tpu.memory_space<vmem>>, %arg4: memref<8x256xf32, #tpu.memory_space<vmem>>) attributes {dimension_semantics = [#tpu.dimension_semantics<parallel>, #tpu.dimension_semantics<parallel>], iteration_bounds = array<i64: 2, 1>, scalar_prefetch = 0 : i64, scratch_operands = 0 : i64, tpu.core_type = #tpu.core_type<tc>, window_params = [{transform_indices = @transform_0, window_bounds = array<i64: 8, 256>}, {transform_indices = @transform_1, window_bounds = array<i64: 8, 1>}, {transform_indices = @transform_2, window_bounds = array<i64: 8, 256>}]} {
    %c0 = arith.constant 0 : index
    %c0_0 = arith.constant 0 : index
    %0 = vector.load %arg2[%c0, %c0_0] : memref<8x256xf32, #tpu.memory_space<vmem>>, vector<8x256xf32>
    %c0_1 = arith.constant 0 : index
    %c0_2 = arith.constant 0 : index
    %1 = vector.load %arg3[%c0_1, %c0_2] : memref<8x1xf32, #tpu.memory_space<vmem>>, vector<8x1xf32>
    %2 = math.cos %1 : vector<8x1xf32>
    %3 = math.sin %1 : vector<8x1xf32>
    %4 = tpu.iota {dimensions = array<i32: 1>} : vector<1x256xi32>
    %c1_i32 = arith.constant 1 : i32
    %5 = vector.broadcast %c1_i32 : i32 to vector<1x256xi32>
    %6 = arith.andi %4, %5 : vector<1x256xi32>
    %c0_i32 = arith.constant 0 : i32
    %7 = vector.broadcast %c0_i32 : i32 to vector<1x256xi32>
    %8 = arith.cmpi eq, %6, %7 : vector<1x256xi32>
    %cst = arith.constant 1.000000e+00 : f32
    %cst_3 = arith.constant -1.000000e+00 : f32
    %9 = vector.broadcast %cst : f32 to vector<1x256xf32>
    %10 = vector.broadcast %cst_3 : f32 to vector<1x256xf32>
    %11 = arith.select %8, %9, %10 : vector<1x256xi1>, vector<1x256xf32>
    %c255_i32 = arith.constant 255 : i32
    %12 = tpu.dynamic_rotate %0 by %c255_i32 dim 1 : vector<8x256xf32>, i32 -> vector<8x256xf32>
    %c1_i32_4 = arith.constant 1 : i32
    %13 = tpu.dynamic_rotate %0 by %c1_i32_4 dim 1 : vector<8x256xf32>, i32 -> vector<8x256xf32>
    %14 = vector.shape_cast %8 : vector<1x256xi1> to vector<1x256xi1>
    %15 = vector.broadcast %14 : vector<1x256xi1> to vector<8x256xi1>
    %16 = arith.select %15, %12, %13 : vector<8x256xi1>, vector<8x256xf32>
    %17 = vector.broadcast %2 : vector<8x1xf32> to vector<8x256xf32>
    %18 = arith.mulf %17, %0 : vector<8x256xf32>
    %19 = vector.broadcast %3 : vector<8x1xf32> to vector<8x256xf32>
    %20 = vector.broadcast %11 : vector<1x256xf32> to vector<8x256xf32>
    %21 = arith.mulf %19, %20 : vector<8x256xf32>
    %22 = arith.mulf %21, %16 : vector<8x256xf32>
    %23 = arith.addf %18, %22 : vector<8x256xf32>
    %c0_5 = arith.constant 0 : index
    %c0_6 = arith.constant 0 : index
    %24 = vector.load %arg4[%c0_5, %c0_6] : memref<8x256xf32, #tpu.memory_space<vmem>>, vector<8x256xf32>
    tpu.vector_store %arg4[%c0_5, %c0_6], %23 {strides = array<i32>} : memref<8x256xf32, #tpu.memory_space<vmem>>, vector<8x256xf32>,
    return
  }
  func.func @transform_0(%arg0: i32, %arg1: i32) -> (i32, i32) {
    %c0_i32 = arith.constant 0 : i32
    return %arg0, %arg1 : i32, i32
  }
  func.func @transform_1(%arg0: i32, %arg1: i32) -> (i32, i32) {
    %c0_i32 = arith.constant 0 : i32
    %c0_i32_0 = arith.constant 0 : i32
    return %arg0, %c0_i32 : i32, i32
  }
  func.func @transform_2(%arg0: i32, %arg1: i32) -> (i32, i32) {
    %c0_i32 = arith.constant 0 : i32
    return %arg0, %arg1 : i32, i32
  }
}

</mosaic_0001>

<llo_original>
// kernel: tpu_custom_call.1
$region0: #{tpu_custom_call.1}
  #allocation0 [shape = 'u32[]', space=smem, size = 0x4, offset = 0x4, fixed_abs, tag = 'smem constant byte address 0x4 - core index']
  #allocation1 [shape = 'u32[144,128]{1,0:T(1,128)}', space=vmem, size = 0x12000, scoped, tag = 'internal scratch']
  %s0 = inlined_call_operand.hbm [shape: f32[16,256], index: 0, kind: input, shape index: {}]
  %s1 = inlined_call_operand.vmem [shape: f32[16,1], index: 1, kind: input, shape index: {}]
  %s2 = inlined_call_operand.hbm [shape: f32[16,256], index: 2, kind: output, shape index: {}]
  %s3 = sld [smem:[#allocation0]]
  $region45: #{tpu_custom_call.1} parent=0
    _
  %s5 = ssub.s32 1, %s3
  %s6 = scalar_select 0, %s5, %s3
  $region1: #{tpu_custom_call.1} parent=0
    #allocation2 [shape = 'u8[16384]{0}', space=vmem, size = 0x4000, scoped, tag = 'input window, operand 0']
    #allocation3 [shape = 's32[2]{0}', space=sflag, size = 0x8, scoped, tag = 'scoped memory for tpu_custom_call.1']
    #allocation4 [shape = 's32[2]{0}', space=sflag, size = 0x8, scoped, tag = 'scoped memory for tpu_custom_call.1']
    #allocation5 [shape = 'u8[16384]{0}', space=vmem, size = 0x4000, scoped, tag = 'output window, operand 0']
    %7 = vsyncpa [#allocation3], 0
    %s8 = scalar_lea.sflag [#allocation3], 1
    %9 = vsyncpa %s8, 0
    %10 = vsyncpa [#allocation4], 0
    %s11 = scalar_lea.sflag [#allocation4], 1
    %12 = vsyncpa %s11, 0
    loop: start=0, step=1, limit=4
    $region2: #{tpu_custom_call.1} parent=1 // loop_pre_header
      _
    $region3: #{tpu_custom_call.1} parent=1 // loop_header
      %s14 = sphi 0, %s18
      %p15 = scmp.ge.s32.totalorder %s14, 4
      %s21 = sphi 0, %s33
      %s22 = sphi 0, %s29
      %s23 = sphi 0, %s21
      %s24 = sphi 0, %s22
      %s25 = sphi 0, %s23
      %s26 = sphi 0, %s24
      %s38 = sphi 0, %s40
      %s41 = sphi 0, %s38
      %s42 = sphi 0, %s41
      %s58 = sphi 0, %s42
      %s64 = sphi 0, %s66
      %s67 = sphi 0, %s64
      %s68 = sphi 0, %s67
      %s84 = sphi 0, %s68
      %s92 = sphi 0, %s94
      %s95 = sphi 0, %s92
      %s96 = sphi 0, %s95
      %s112 = sphi 0, %s96
    $region4: #{tpu_custom_call.1} parent=1 // loop_header_branch
      %17 = sbr.rel (%p15) target = $region8
    $region5: #{tpu_custom_call.1} parent=1 // loop_body
      %s19 = ssub.s32 %s14, 1
      %s20 = ssub.s32 %s14, 2
      %s27 = sadd.s32 1, %s22
      %p28 = scmp.ge.s32.totalorder %s27, 1
      %s29 = scalar_select %p28, 0, %s27
      %s30 = sadd.s32 1, %s21
      %s31 = scalar_select %p28, %s30, %s21
      %p32 = scmp.ge.s32.totalorder %s31, 2
      %s33 = scalar_select %p32, 0, %s31
      %s34 = ssub.s32 %s21, %s33
      %s35 = ssub.s32 %s22, %s29
      %s36 = sor.u32 %s34, %s35
      %p37 = scmp.eq.s32.totalorder %s36, 0
      %s39 = sadd.s32 %s38, 1
      %s40 = scalar_select %p37, %s38, %s39
      %p43 = pneg %p37
      %p44 = scmp.eq.s32.totalorder %s14, 1
      %p45 = por %p43, %p44
      %p46 = scmp.ne.s32.totalorder %s38, %s41
      %p47 = scmp.eq.s32.totalorder %s14, 0
      %p48 = por %p46, %p47
      %p49 = scmp.ne.s32.totalorder %s38, %s41
      %p50 = scmp.eq.s32.totalorder %s19, 1
      %p51 = por %p49, %p50
      %p52 = scmp.ne.s32.totalorder %s41, %s42
      %p53 = scmp.eq.s32.totalorder %s19, 0
      %p54 = por %p52, %p53
      %p55 = scmp.ne.s32.totalorder %s41, %s42
      %p56 = scmp.eq.s32.totalorder %s20, 1
      %p57 = por %p55, %p56
      %p59 = scmp.ne.s32.totalorder %s42, %s58
      %p60 = scmp.eq.s32.totalorder %s20, 0
      %p61 = por %p59, %p60
      %s62 = ssub.s32 %s21, %s33
      %p63 = scmp.eq.s32.totalorder %s62, 0
      %s65 = sadd.s32 %s64, 1
      %s66 = scalar_select %p63, %s64, %s65
      %p69 = pneg %p63
      %p70 = scmp.eq.s32.totalorder %s14, 1
      %p71 = por %p69, %p70
      %p72 = scmp.ne.s32.totalorder %s64, %s67
      %p73 = scmp.eq.s32.totalorder %s14, 0
      %p74 = por %p72, %p73
      %p75 = scmp.ne.s32.totalorder %s64, %s67
      %p76 = scmp.eq.s32.totalorder %s19, 1
      %p77 = por %p75, %p76
      %p78 = scmp.ne.s32.totalorder %s67, %s68
      %p79 = scmp.eq.s32.totalorder %s19, 0
      %p80 = por %p78, %p79
      %p81 = scmp.ne.s32.totalorder %s67, %s68
      %p82 = scmp.eq.s32.totalorder %s20, 1
      %p83 = por %p81, %p82
      %p85 = scmp.ne.s32.totalorder %s68, %s84
      %p86 = scmp.eq.s32.totalorder %s20, 0
      %p87 = por %p85, %p86
      %s88 = ssub.s32 %s21, %s33
      %s89 = ssub.s32 %s22, %s29
      %s90 = sor.u32 %s88, %s89
      %p91 = scmp.eq.s32.totalorder %s90, 0
      %s93 = sadd.s32 %s92, 1
      %s94 = scalar_select %p91, %s92, %s93
      %p97 = pneg %p91
      %p98 = scmp.eq.s32.totalorder %s14, 1
      %p99 = por %p97, %p98
      %p100 = scmp.ne.s32.totalorder %s92, %s95
      %p101 = scmp.eq.s32.totalorder %s14, 0
      %p102 = por %p100, %p101
      %p103 = scmp.ne.s32.totalorder %s92, %s95
      %p104 = scmp.eq.s32.totalorder %s19, 1
      %p105 = por %p103, %p104
      %p106 = scmp.ne.s32.totalorder %s95, %s96
      %p107 = scmp.eq.s32.totalorder %s19, 0
      %p108 = por %p106, %p107
      %p109 = scmp.ne.s32.totalorder %s95, %s96
      %p110 = scmp.eq.s32.totalorder %s20, 1
      %p111 = por %p109, %p110
      %p113 = scmp.ne.s32.totalorder %s96, %s112
      %p114 = scmp.eq.s32.totalorder %s20, 0
      %p115 = por %p113, %p114
      %p116 = scmp.le.s32.totalorder 1, %s14
      %p117 = scmp.lt.s32.totalorder %s14, 3
      %p118 = pnand %p116, %p117
      %p119 = pneg %p118
      // Predicated region
      $region9: #{tpu_custom_call.1} parent=5 // pred_check
        _
      $region10: #{tpu_custom_call.1} parent=5 // pred_check_branch
        %121 = sbr.rel (%p118) target = $region12
      $region11: #{tpu_custom_call.1} parent=5 // pred_region
        %s122 = ssub.s32 %s14, 1
      $region12: #{tpu_custom_call.1} parent=5 // pred_fallthru
        _
      %p123 = scmp.lt.s32.totalorder %s14, 2
      // Predicated region
      $region13: #{tpu_custom_call.1} parent=5 // pred_check
        %p124 = pneg %p123
      $region14: #{tpu_custom_call.1} parent=5 // pred_check_branch
        %126 = sbr.rel (%p124) target = $region16
      $region15: #{tpu_custom_call.1} parent=5 // pred_region
        // Predicated region
        $region17: #{tpu_custom_call.1} parent=15 // pred_check
          %p127 = pneg %p48
        $region18: #{tpu_custom_call.1} parent=15 // pred_check_branch
          %129 = sbr.rel (%p127) target = $region20
        $region19: #{tpu_custom_call.1} parent=15 // pred_region
          %s130 = sand.u32 %s38, 1
          %s131 = scalar_lea.sflag [#allocation3], %s130
          %s132 = sand.u32 %s38, 1
          %s133 = smul.addr %s132, 16
          %s134 = scalar_lea.vmem [#allocation2], %s133
          %s135 = smul.u32 2, %s22
          %s137 = ssub.s32 256, 256
          %138 = vsyncadd %s131, %s137
          %s139 = smul.addr %s21, 2
          %s140 = sadd.s32 %s135, %s139
          %s141 = smul.addr %s140, 128
          %s142 = scalar_lea.hbm %s0, %s141
          %s144 = sshll.u32 %s134, 4
          %s145 = int_to_ptr.vmem [resolvable:$true] %s144
          %147 = dma.hbm_to_vmem [thread:$0]  %s142, 256, %s145, %s131
        $region20: #{tpu_custom_call.1} parent=15 // pred_fallthru
          _
        // Predicated region
        $region21: #{tpu_custom_call.1} parent=15 // pred_check
          %p148 = pneg %p74
        $region22: #{tpu_custom_call.1} parent=15 // pred_check_branch
          %150 = sbr.rel (%p148) target = $region24
        $region23: #{tpu_custom_call.1} parent=15 // pred_region
          %p151 = scmp.lt.s32.totalorder %s21, 1
          %s152 = scalar_select %p151, %s21, 1
          %s153 = smul.addr %s152, 8
          %s154 = scalar_lea.vmem %s1, %s153
        $region24: #{tpu_custom_call.1} parent=15 // pred_fallthru
          _
      $region16: #{tpu_custom_call.1} parent=5 // pred_fallthru
        _
      %p155 = scmp.le.s32.totalorder 1, %s14
      %p156 = scmp.lt.s32.totalorder %s14, 3
      %p157 = pnand %p155, %p156
      %p158 = pneg %p157
      // Predicated region
      $region25: #{tpu_custom_call.1} parent=5 // pred_check
        _
      $region26: #{tpu_custom_call.1} parent=5 // pred_check_branch
        %160 = sbr.rel (%p157) target = $region28
      $region27: #{tpu_custom_call.1} parent=5 // pred_region
        %s161 = ssub.s32 %s14, 1
        %s162 = sand.u32 %s41, 1
        %s163 = scalar_lea.sflag [#allocation3], %s162
        %s164 = sand.u32 %s41, 1
        %s165 = smul.addr %s164, 16
        %s166 = scalar_lea.vmem [#allocation2], %s165
        // Predicated region
        $region29: #{tpu_custom_call.1} parent=27 // pred_check
          %p167 = pneg %p54
        $region30: #{tpu_custom_call.1} parent=27 // pred_check_branch
          %169 = sbr.rel (%p167) target = $region32
        $region31: #{tpu_custom_call.1} parent=27 // pred_region
          %170 = dma.done %s163, 256
        $region32: #{tpu_custom_call.1} parent=27 // pred_fallthru
          _
        %s171 = sand.u32 %s41, 1
        %s172 = scalar_lea.sflag [#allocation3], %s171
        %s173 = sand.u32 %s41, 1
        %s174 = smul.addr %s173, 16
        %s175 = scalar_lea.vmem [#allocation2], %s174
        %p176 = pneg %p54
        %p177 = pneg %p51
        %p178 = scmp.lt.s32.totalorder %s23, 1
        %s179 = scalar_select %p178, %s23, 1
        %s180 = smul.addr %s179, 8
        %s181 = scalar_lea.vmem %s1, %s180
        %p182 = pneg %p80
        %p183 = pneg %p77
        %p184 = pneg %p108
        %p185 = pneg %p105
        %s186 = sand.u32 %s95, 1
        %s187 = scalar_lea.sflag [#allocation4], %s186
        %s188 = sand.u32 %s95, 1
        %s189 = smul.addr %s188, 16
        %s190 = scalar_lea.vmem [#allocation5], %s189
        %s191 = smul.u32 2, %s24
        %p192 = scmp.lt.s32.totalorder %s23, 1
        %s193 = scalar_select %p192, %s23, 1
        %s194 = smul.addr %s193, 8
        %s195 = scalar_lea.vmem %s1, %s194
        %s196 = smul.u32 2, %s24
        %v197 = vld [vmem:[%s166] sm:$0xff]
        %v198 = vld [vmem:[%s166 + $0x8] sm:$0xff]
        %v199 = vld [vmem:[%s195] sm:$0xff]
        %v200 = vand.u32 2147483647, %v199
        %vm201 = vcmp.le.f32.partialorder %v200, 0.7853982
        %vm202 = vcmp.lt.s32.totalorder %v199, 0
        %v203 = vand.u32 %v199, 2139095040
        %v204 = vshrl.u32 %v203, 23
        %v205 = vsub.s32 %v204, 127
        %v206 = vand.u32 2147483647, %v199
        %v207 = vand.u32 %v206, 8388607
        %v208 = vor.u32 %v207, 8388608
        %v209 = vsub.s32 0, %v208
        %v210 = vadd.s32 %v205, 1
        %vm211 = vcmp.gt.s32.totalorder %v210, 0
        %v212 = vsel %vm211, %v210, 0
        %v213 = vshrl.u32 %v212, 5
        %v214 = vand.u32 %v212, 31
        %v215 = vsub.s32 32, %v214
        %v216 = vshrl.u32 683565275, %v215
        %v217 = vshll.u32 683565275, %v214
        %v218 = vshrl.u32 2475754826, %v215
        %v219 = vor.u32 %v217, %v218
        %v220 = vshll.u32 2475754826, %v214
        %v221 = vshrl.u32 2131351028, %v215
        %v222 = vor.u32 %v220, %v221
        %v223 = vshll.u32 2131351028, %v214
        %v224 = vshrl.u32 2102212464, %v215
        %v225 = vor.u32 %v223, %v224
        %v226 = vshll.u32 2102212464, %v214
        %v227 = vshrl.u32 920167782, %v215
        %v228 = vor.u32 %v226, %v227
        %v229 = vshll.u32 920167782, %v214
        %v230 = vshrl.u32 1326507024, %v215
        %v231 = vor.u32 %v229, %v230
        %vm232 = vcmp.lt.s32.totalorder %v213, 1
        %vm233 = vcmp.lt.s32.totalorder %v213, 2
        %vm234 = vcmp.lt.s32.totalorder %v213, 3
        %vm235 = vcmp.lt.s32.totalorder %v213, 4
        %v236 = vsel %vm232, %v216, %v219
        %v237 = vsel %vm235, %v225, 2102212464
        %v238 = vsel %vm234, %v222, %v237
        %v239 = vsel %vm233, %v236, %v238
        %v240 = vsel %vm232, %v219, %v222
        %v241 = vsel %vm235, %v228, 920167782
        %v242 = vsel %vm234, %v225, %v241
        %v243 = vsel %vm233, %v240, %v242
        %v244 = vsel %vm232, %v222, %v225
        %v245 = vsel %vm235, %v231, 1326507024
        %v246 = vsel %vm234, %v228, %v245
        %v247 = vsel %vm233, %v244, %v246
        %v248 = vshll.u32 %v208, 8
        %v249 = vmul.u32.u64.compose %v248, %v247
        %v250 = vextract.low.u32 %v249
        %v251 = vextract.high.u32 %v249
        %v252 = vmul.u32.u64.compose %v248, %v243
        %v253 = vextract.low.u32 %v252
        %v254 = vextract.high.u32 %v252
        %v255 = vmul.u32 %v248, %v239
        %v256 = vadd.s32 %v251, %v253
        %vm257 = vc.u32 %v251, %v253
        %v258 = vadd.s32 %v254, 1
        %v259 = vsel %vm257, %v258, %v254
        %v260 = vadd.s32 %v255, %v259
        %v261 = vadd.s32 %v260, 536870912
        %v262 = vshrl.u32 %v261, 30
        %v263 = vshll.u32 %v262, 30
        %v264 = vsub.s32 %v260, %v263
        %vm265 = vcmp.lt.s32.totalorder %v264, 0
        %v266 = vsub.s32 0, %v264
        %v267 = vsel %vm265, %v266, %v264
        %v268 = vclz %v267
        %v269 = vsub.s32 %v268, 2
        %vm270 = vcmp.gt.s32.totalorder 0, %v269
        %v271 = vsel %vm270, 0, %v269
        %v272 = vsub.s32 32, %v271
        %v273 = vshll.u32 %v264, %v271
        %v274 = vshrl.u32 %v256, %v272
        %v275 = vor.u32 %v273, %v274
        %v276 = vsub.s32 4294967266, %v271
        %v277 = vadd.s32 %v276, 127
        %v278 = vshll.u32 %v277, 23
        %v279 = vor.u32 4788187, %v278
        %v280 = vand.u32 2147483647, %v279
        %v282 = vcvt.s32.f32 %v275
        %v283 = vmul.f32 %v282, %v280
        %v284 = vxor.u32 %v283, 2147483648
        %v285 = vsel %vm202, %v284, %v283
        %v286 = vsub.s32 4, %v262
        %v287 = vsel %vm202, %v286, %v262
        %v288 = vsel %vm201, %v199, %v285
        %v289 = vsel %vm201, 0, %v287
        %v290 = vcosq.f32.pop %v288
        %v291 = vsinq.f32.pop %v288
        %vm292 = vweird.f32 %v199
        %v293 = vand.u32 %v289, 3
        %vm294 = vcmp.lt.s32.totalorder %v293, 2
        %vm295 = vcmp.eq.s32.totalorder %v293, 0
        %v296 = vxor.u32 %v291, 2147483648
        %v297 = vsel %vm295, %v290, %v296
        %vm298 = vcmp.eq.s32.totalorder %v293, 2
        %v299 = vxor.u32 %v290, 2147483648
        %v300 = vsel %vm298, %v299, %v291
        %v301 = vsel %vm294, %v297, %v300
        %v302 = vsel %vm292, nan, %v301
        %v303 = vand.u32 2147483647, %v199
        %vm304 = vcmp.le.f32.partialorder %v303, 0.7853982
        %vm305 = vcmp.lt.s32.totalorder %v199, 0
        %v306 = vand.u32 %v199, 2139095040
        %v307 = vshrl.u32 %v306, 23
        %v308 = vsub.s32 %v307, 127
        %v309 = vand.u32 2147483647, %v199
        %v310 = vand.u32 %v309, 8388607
        %v311 = vor.u32 %v310, 8388608
        %v312 = vsub.s32 0, %v311
        %v313 = vadd.s32 %v308, 1
        %vm314 = vcmp.gt.s32.totalorder %v313, 0
        %v315 = vsel %vm314, %v313, 0
        %v316 = vshrl.u32 %v315, 5
        %v317 = vand.u32 %v315, 31
        %v318 = vsub.s32 32, %v317
        %v319 = vshrl.u32 683565275, %v318
        %v320 = vshll.u32 683565275, %v317
        %v321 = vshrl.u32 2475754826, %v318
        %v322 = vor.u32 %v320, %v321
        %v323 = vshll.u32 2475754826, %v317
        %v324 = vshrl.u32 2131351028, %v318
        %v325 = vor.u32 %v323, %v324
        %v326 = vshll.u32 2131351028, %v317
        %v327 = vshrl.u32 2102212464, %v318
        %v328 = vor.u32 %v326, %v327
        %v329 = vshll.u32 2102212464, %v317
        %v330 = vshrl.u32 920167782, %v318
        %v331 = vor.u32 %v329, %v330
        %v332 = vshll.u32 920167782, %v317
        %v333 = vshrl.u32 1326507024, %v318
        %v334 = vor.u32 %v332, %v333
        %vm335 = vcmp.lt.s32.totalorder %v316, 1
        %vm336 = vcmp.lt.s32.totalorder %v316, 2
        %vm337 = vcmp.lt.s32.totalorder %v316, 3
        %vm338 = vcmp.lt.s32.totalorder %v316, 4
        %v339 = vsel %vm335, %v319, %v322
        %v340 = vsel %vm338, %v328, 2102212464
        %v341 = vsel %vm337, %v325, %v340
        %v342 = vsel %vm336, %v339, %v341
        %v343 = vsel %vm335, %v322, %v325
        %v344 = vsel %vm338, %v331, 920167782
        %v345 = vsel %vm337, %v328, %v344
        %v346 = vsel %vm336, %v343, %v345
        %v347 = vsel %vm335, %v325, %v328
        %v348 = vsel %vm338, %v334, 1326507024
        %v349 = vsel %vm337, %v331, %v348
        %v350 = vsel %vm336, %v347, %v349
        %v351 = vshll.u32 %v311, 8
        %v352 = vmul.u32.u64.compose %v351, %v350
        %v353 = vextract.low.u32 %v352
        %v354 = vextract.high.u32 %v352
        %v355 = vmul.u32.u64.compose %v351, %v346
        %v356 = vextract.low.u32 %v355
        %v357 = vextract.high.u32 %v355
        %v358 = vmul.u32 %v351, %v342
        %v359 = vadd.s32 %v354, %v356
        %vm360 = vc.u32 %v354, %v356
        %v361 = vadd.s32 %v357, 1
        %v362 = vsel %vm360, %v361, %v357
        %v363 = vadd.s32 %v358, %v362
        %v364 = vadd.s32 %v363, 536870912
        %v365 = vshrl.u32 %v364, 30
        %v366 = vshll.u32 %v365, 30
        %v367 = vsub.s32 %v363, %v366
        %vm368 = vcmp.lt.s32.totalorder %v367, 0
        %v369 = vsub.s32 0, %v367
        %v370 = vsel %vm368, %v369, %v367
        %v371 = vclz %v370
        %v372 = vsub.s32 %v371, 2
        %vm373 = vcmp.gt.s32.totalorder 0, %v372
        %v374 = vsel %vm373, 0, %v372
        %v375 = vsub.s32 32, %v374
        %v376 = vshll.u32 %v367, %v374
        %v377 = vshrl.u32 %v359, %v375
        %v378 = vor.u32 %v376, %v377
        %v379 = vsub.s32 4294967266, %v374
        %v380 = vadd.s32 %v379, 127
        %v381 = vshll.u32 %v380, 23
        %v382 = vor.u32 4788187, %v381
        %v383 = vand.u32 2147483647, %v382
        %v385 = vcvt.s32.f32 %v378
        %v386 = vmul.f32 %v385, %v383
        %v387 = vxor.u32 %v386, 2147483648
        %v388 = vsel %vm305, %v387, %v386
        %v389 = vsub.s32 4, %v365
        %v390 = vsel %vm305, %v389, %v365
        %v391 = vsel %vm304, %v199, %v388
        %v392 = vsel %vm304, 0, %v390
        %v393 = vcosq.f32.pop %v391
        %v394 = vsinq.f32.pop %v391
        %vm395 = vweird.f32 %v199
        %v396 = vadd.s32 %v392, 3
        %v397 = vand.u32 %v396, 3
        %vm398 = vcmp.lt.s32.totalorder %v397, 2
        %vm399 = vcmp.eq.s32.totalorder %v397, 0
        %v400 = vxor.u32 %v394, 2147483648
        %v401 = vsel %vm399, %v393, %v400
        %vm402 = vcmp.eq.s32.totalorder %v397, 2
        %v403 = vxor.u32 %v393, 2147483648
        %v404 = vsel %vm402, %v403, %v394
        %v405 = vsel %vm398, %v401, %v404
        %v406 = vsel %vm395, nan, %v405
        %v407 = vlaneseq
        %v408 = vand.u32 %v407, 127
        %v409 = vadd.s32 %v408, 128
        %v410 = vand.u32 %v408, 1
        %v411 = vand.u32 %v409, 1
        %vm412 = vcmp.eq.s32.totalorder %v410, 0
        %vm413 = vcmp.eq.s32.totalorder %v411, 0
        %v414 = vsel %vm412, 1.0, -1.0
        %v415 = vsel %vm413, 1.0, -1.0
        %416 = vrot.lane.b32.xlu0 %v197, 127
        %v417 = vpop.permute.xlu0 %416
        %418 = vrot.lane.b32.xlu0 %v198, 127
        %v419 = vpop.permute.xlu0 %418
        %vm420 = vcmp.lt.s32.totalorder %v408, 127
        %v421 = vsel %vm420, %v417, %v419
        %v422 = vsel %vm420, %v419, %v417
        %423 = vrot.lane.b32.xlu0 %v197, 1
        %v424 = vpop.permute.xlu0 %423
        %425 = vrot.lane.b32.xlu0 %v198, 1
        %v426 = vpop.permute.xlu0 %425
        %vm427 = vcmp.lt.s32.totalorder %v408, 1
        %v428 = vsel %vm427, %v424, %v426
        %v429 = vsel %vm427, %v426, %v424
        %v430 = vsel %vm412, 1, 0
        %v431 = vsel %vm413, 1, 0
        %vm432 = vcmp.eq.s32.totalorder %v430, 1
        %vm433 = vcmp.eq.s32.totalorder %v431, 1
        %v434 = vsel %vm432, %v421, %v429
        %v435 = vsel %vm433, %v422, %v428
        %437 = vset.pattern.permute.xlu0 0
        %438 = vperm.xlu0 %437, %v302
        %v439 = vpop.permute.xlu0 %438
        %v441 = vmul.f32 %v439, %v197
        %v442 = vmul.f32 %v439, %v198
        %444 = vset.pattern.permute.xlu0 0
        %445 = vperm.xlu0 %444, %v406
        %v446 = vpop.permute.xlu0 %445
        %v448 = vmul.f32 %v446, %v414
        %v449 = vmul.f32 %v446, %v415
        %v450 = vmul.f32 %v448, %v434
        %v451 = vmul.f32 %v449, %v435
        %v452 = vadd.f32 %v441, %v450
        %v453 = vadd.f32 %v442, %v451
        %454 = vst [vmem:[%s190] sm:$0xff] %v452
        %455 = vst [vmem:[%s190 + $0x8] sm:$0xff] %v453
        %s456 = sand.u32 %s95, 1
        %s457 = scalar_lea.sflag [#allocation4], %s456
        %s458 = sand.u32 %s95, 1
        %s459 = smul.addr %s458, 16
        %s460 = scalar_lea.vmem [#allocation5], %s459
        // Predicated region
        $region33: #{tpu_custom_call.1} parent=27 // pred_check
          %p461 = pneg %p105
        $region34: #{tpu_custom_call.1} parent=27 // pred_check_branch
          %463 = sbr.rel (%p461) target = $region36
        $region35: #{tpu_custom_call.1} parent=27 // pred_region
          %s464 = smul.u32 2, %s24
          %s466 = ssub.s32 256, 256
          %467 = vsyncadd %s457, %s466
          %s468 = smul.addr %s23, 2
          %s469 = sadd.s32 %s464, %s468
          %s470 = smul.addr %s469, 128
          %s471 = scalar_lea.hbm %s2, %s470
          %s473 = sshll.u32 %s460, 4
          %s474 = int_to_ptr.vmem [resolvable:$true] %s473
          %476 = dma.vmem_to_hbm [thread:$0]  %s474, 256, %s471, %s457
        $region36: #{tpu_custom_call.1} parent=27 // pred_fallthru
          _
      $region28: #{tpu_custom_call.1} parent=5 // pred_fallthru
        _
      %p477 = scmp.le.s32.totalorder 2, %s14
      // Predicated region
      $region37: #{tpu_custom_call.1} parent=5 // pred_check
        %p478 = pneg %p477
      $region38: #{tpu_custom_call.1} parent=5 // pred_check_branch
        %480 = sbr.rel (%p478) target = $region40
      $region39: #{tpu_custom_call.1} parent=5 // pred_region
        %s481 = ssub.s32 %s14, 2
        // Predicated region
        $region41: #{tpu_custom_call.1} parent=39 // pred_check
          %p482 = pneg %p111
        $region42: #{tpu_custom_call.1} parent=39 // pred_check_branch
          %484 = sbr.rel (%p482) target = $region44
        $region43: #{tpu_custom_call.1} parent=39 // pred_region
          %s485 = sand.u32 %s96, 1
          %s486 = scalar_lea.sflag [#allocation4], %s485
          %s487 = sand.u32 %s96, 1
          %s488 = smul.addr %s487, 16
          %s489 = scalar_lea.vmem [#allocation5], %s488
          %490 = dma.done %s486, 256
        $region44: #{tpu_custom_call.1} parent=39 // pred_fallthru
          _
      $region40: #{tpu_custom_call.1} parent=5 // pred_fallthru
        _
    $region6: #{tpu_custom_call.1} parent=1 // loop_footer
      %s18 = sadd.s32 1, %s14
    $region7: #{tpu_custom_call.1} parent=1 // loop_footer_branch
      %13 = sbr.rel target = $region3
    $region8: #{tpu_custom_call.1} parent=1 // loop_exit
      _
    %491 = vsyncpa [#allocation3], 1
    %s492 = scalar_lea.sflag [#allocation3], 1
    %493 = vsyncpa %s492, 1
    %494 = vsyncpa [#allocation4], 1
    %s495 = scalar_lea.sflag [#allocation4], 1
    %496 = vsyncpa %s495, 1

</llo_original>
